<compile_context>
chip_gen: v5e
topology: v5e:2x2
jax: 0.10.0
libtpu: 0.0.40
codegen_flags: <defaults>
</compile_context>

<pallas_src>
import functools

import jax
import jax.numpy as jnp
from jax import lax
from jax.experimental import pallas as pl
from jax.experimental.pallas import tpu as pltpu

BN_EPS = 1e-5


# ---------------------------------------------------------------------------
# Pallas kernels
# ---------------------------------------------------------------------------
def _conv_bn_relu_kernel(patches_ref, w_ref, gamma_ref, beta_ref, out_ref):
    """Fused Conv1d (as one folded matmul) + BatchNorm1d(train) + ReLU.

    patches_ref: (C_in*K, M) bf16, M = N*L_out   (lane-dense over M)
    w_ref:       (C_out, C_in*K) bf16
    gamma/beta:  (C_out, 1) f32
    out_ref:     (C_out, M) f32
    """
    # Single MXU matmul over the folded (channel, tap) contraction, f32 accumulate.
    acc = jnp.dot(w_ref[...], patches_ref[...], preferred_element_type=jnp.float32)

    # Conv bias is intentionally NOT added: BatchNorm's batch-mean subtraction below
    # cancels any per-channel pre-BN bias exactly.

    # One-pass BN statistics over M (biased variance, PyTorch training mode).
    m = acc.shape[1]
    inv_m = 1.0 / m
    mean = jnp.sum(acc, axis=1, keepdims=True) * inv_m
    var = jnp.sum(acc * acc, axis=1, keepdims=True) * inv_m - mean * mean

    scale = lax.rsqrt(var + BN_EPS) * gamma_ref[...]
    y = (acc - mean) * scale + beta_ref[...]
    out_ref[...] = jnp.maximum(y, 0.0)


def _mlp_head_kernel(x_ref, w1_ref, b1_ref, w2_ref, b2_ref, out_ref):
    """Fused fc1 -> ReLU -> fc2 -> log_softmax.

    x_ref: (N, F) bf16; w1: (F, H) bf16; b1: (1, H) f32; w2: (H, C) bf16; b2: (1, C) f32
    out_ref: (N, C) f32  (log-probabilities)
    """
    h = jnp.dot(x_ref[...], w1_ref[...], preferred_element_type=jnp.float32) + b1_ref[...]
    h = jnp.maximum(h, 0.0)
    logits = jnp.dot(h.astype(w2_ref.dtype), w2_ref[...],
                     preferred_element_type=jnp.float32) + b2_ref[...]
    mx = jnp.max(logits, axis=1, keepdims=True)
    shifted = logits - mx
    lse = jnp.log(jnp.sum(jnp.exp(shifted), axis=1, keepdims=True))
    out_ref[...] = shifted - lse


# ---------------------------------------------------------------------------
# Wrappers
# ---------------------------------------------------------------------------
def conv1d_bn_relu_pool(x, weight, gamma, beta, pool):
    """x: (N, C_in, L) f32; weight: (C_out, C_in, K) f32 (PyTorch Conv1d layout).
    Returns (N, C_out, (L-K+1)//pool) f32."""
    N, C_in, L = x.shape
    C_out, _, K = weight.shape
    L_out = L - K + 1
    M = N * L_out

    # im2col with the tap axis folded into the contraction dim, arranged lane-dense
    # over M so the kernel's matmul/accumulator/output are (C_out, M).
    win = jnp.stack([x[:, :, k:k + L_out] for k in range(K)], axis=2)       # (N, C_in, K, L_out)
    patches = jnp.transpose(win, (1, 2, 0, 3)).reshape(C_in * K, M)
    patches = patches.astype(jnp.bfloat16)
    w_fold = weight.reshape(C_out, C_in * K).astype(jnp.bfloat16)

    y = pl.pallas_call(
        _conv_bn_relu_kernel,
        out_shape=jax.ShapeDtypeStruct((C_out, M), jnp.float32),
        in_specs=[pl.BlockSpec(memory_space=pltpu.MemorySpace.VMEM)] * 4,
        out_specs=pl.BlockSpec(memory_space=pltpu.MemorySpace.VMEM),
    )(
        patches,
        w_fold,
        gamma.reshape(C_out, 1).astype(jnp.float32),
        beta.reshape(C_out, 1).astype(jnp.float32),
    )

    # (C_out, N*L_out) -> (N, C_out, L_out)
    y = jnp.transpose(y.reshape(C_out, N, L_out), (1, 0, 2))

    # MaxPool1d(pool): floor mode, stride == kernel_size (PyTorch default).
    L_pool = L_out // pool
    return y[:, :, :L_pool * pool].reshape(N, C_out, L_pool, pool).max(axis=-1)


def mlp_head(flat, w1, b1, w2, b2):
    N, _ = flat.shape
    H = w1.shape[1]
    C = w2.shape[1]
    return pl.pallas_call(
        _mlp_head_kernel,
        out_shape=jax.ShapeDtypeStruct((N, C), jnp.float32),
        in_specs=[pl.BlockSpec(memory_space=pltpu.MemorySpace.VMEM)] * 5,
        out_specs=pl.BlockSpec(memory_space=pltpu.MemorySpace.VMEM),
    )(
        flat.astype(jnp.bfloat16),
        w1.astype(jnp.bfloat16),
        b1.reshape(1, H).astype(jnp.float32),
        w2.astype(jnp.bfloat16),
        b2.reshape(1, C).astype(jnp.float32),
    )


def cnn1d_forward(x, conv_params, w1, b1, w2, b2, *, poollist):
    """Full cnn1d forward. conv_params: list of (weight, bias, gamma, beta)."""
    h = x
    for (w, _b, gamma, beta), pool in zip(conv_params, poollist):
        # Conv bias `_b` is mathematically cancelled by the following training-mode
        # BatchNorm mean subtraction, so it is not passed to the kernel.
        h = conv1d_bn_relu_pool(h, w, gamma, beta, pool)
    n = h.shape[0]
    flat = h.reshape(n, -1)                      # nn.Flatten
    # TODO(synk): nn.Dropout is treated as identity (deterministic / inference forward);
    # training-mode dropout would use pltpu.prng_seed + stateful_bernoulli in-kernel.
    return mlp_head(flat, w1, b1, w2, b2)


# ---------------------------------------------------------------------------
# Pure-JAX reference (same bf16 rounding of matmul operands, f32 accumulation)
# ---------------------------------------------------------------------------
def _reference_forward(x, conv_params, poollist, w1, b1, w2, b2):
    h = x
    for (w, b, gamma, beta), pool in zip(conv_params, poollist):
        N, C_in, L = h.shape
        C_out, _, K = w.shape
        L_out = L - K + 1
        win = jnp.stack([h[:, :, k:k + L_out] for k in range(K)], axis=2)   # (N, C_in, K, L_out)
        win_b = win.astype(jnp.bfloat16).astype(jnp.float32)
        w_b = w.astype(jnp.bfloat16).astype(jnp.float32)
        z = jnp.einsum("nckl,ock->nol", win_b, w_b) + b.reshape(1, C_out, 1)
        mean = jnp.mean(z, axis=(0, 2), keepdims=True)
        var = jnp.mean(jnp.square(z), axis=(0, 2), keepdims=True) - jnp.square(mean)
        z = (z - mean) * lax.rsqrt(var + BN_EPS) * gamma.reshape(1, C_out, 1) \
            + beta.reshape(1, C_out, 1)
        z = jnp.maximum(z, 0.0)
        L_pool = L_out // pool
        h = z[:, :, :L_pool * pool].reshape(N, C_out, L_pool, pool).max(axis=-1)

    n = h.shape[0]
    flat = h.reshape(n, -1)
    flat_b = flat.astype(jnp.bfloat16).astype(jnp.float32)
    w1_b = w1.astype(jnp.bfloat16).astype(jnp.float32)
    hh = jnp.maximum(flat_b @ w1_b + b1.reshape(1, -1), 0.0)
    hh_b = hh.astype(jnp.bfloat16).astype(jnp.float32)
    w2_b = w2.astype(jnp.bfloat16).astype(jnp.float32)
    logits = hh_b @ w2_b + b2.reshape(1, -1)
    return jax.nn.log_softmax(logits, axis=1)


# ---------------------------------------------------------------------------
if __name__ == "__main__":
    # Module hyper-parameters (small, consistent with cnn1d(chlist, kslist, poollist, ...))
    chlist = [4, 8, 16]
    kslist = [5, 3]
    poollist = [2, 2]
    classes = 10
    linear2in = 32
    N, L_in = 2, 64

    keys = iter(jax.random.split(jax.random.PRNGKey(0), 32))
    x = jax.random.normal(next(keys), (N, chlist[0], L_in), jnp.float32)

    conv_params = []
    for i in range(len(chlist) - 1):
        cin, cout, k = chlist[i], chlist[i + 1], kslist[i]
        bound = float(1.0 / (cin * k) ** 0.5)
        w = jax.random.uniform(next(keys), (cout, cin, k), jnp.float32, -bound, bound)
        b = jax.random.uniform(next(keys), (cout,), jnp.float32, -bound, bound)
        gamma = 1.0 + 0.1 * jax.random.normal(next(keys), (cout,), jnp.float32)
        beta = 0.1 * jax.random.normal(next(keys), (cout,), jnp.float32)
        conv_params.append((w, b, gamma, beta))

    # LazyLinear in_features resolved statically from the conv stack geometry.
    L = L_in
    for k, p in zip(kslist, poollist):
        L = (L - k + 1) // p
    feat = chlist[-1] * L                       # 16 * 14 = 224

    bound1 = float(1.0 / feat ** 0.5)
    w1 = jax.random.uniform(next(keys), (feat, linear2in), jnp.float32, -bound1, bound1)
    b1 = jax.random.uniform(next(keys), (linear2in,), jnp.float32, -bound1, bound1)
    bound2 = float(1.0 / linear2in ** 0.5)
    w2 = jax.random.uniform(next(keys), (linear2in, classes), jnp.float32, -bound2, bound2)
    b2 = jax.random.uniform(next(keys), (classes,), jnp.float32, -bound2, bound2)

    fwd = jax.jit(functools.partial(cnn1d_forward, poollist=tuple(poollist)))
    out = fwd(x, conv_params, w1, b1, w2, b2)
    out = jax.block_until_ready(out)

    assert out.shape == (N, classes), out.shape

    ref = _reference_forward(x, conv_params, poollist, w1, b1, w2, b2)
    max_err = float(jnp.max(jnp.abs(out - ref)))
    assert max_err < 1e-2, f"mismatch vs reference: {max_err}"

    # log-probabilities must exponentiate to a distribution.
    prob_err = float(jnp.max(jnp.abs(jnp.sum(jnp.exp(out), axis=1) - 1.0)))
    assert prob_err < 1e-3, f"log_softmax not normalized: {prob_err}"

    print("KERNEL_OK")
</pallas_src>

<mosaic_0001>
module attributes {stable_mosaic.version = 11 : i64} {
  func.func @_conv_bn_relu_kernel(%arg0: memref<20x120xbf16, #tpu.memory_space<vmem>>, %arg1: memref<8x20xbf16, #tpu.memory_space<vmem>>, %arg2: memref<8x1xf32, #tpu.memory_space<vmem>>, %arg3: memref<8x1xf32, #tpu.memory_space<vmem>>, %arg4: memref<8x120xf32, #tpu.memory_space<vmem>>) attributes {dimension_semantics = [], scalar_prefetch = 0 : i64, scratch_operands = 0 : i64, tpu.core_type = #tpu.core_type<tc>} {
    %c0 = arith.constant 0 : index
    %c0_0 = arith.constant 0 : index
    %0 = vector.load %arg1[%c0, %c0_0] : memref<8x20xbf16, #tpu.memory_space<vmem>>, vector<8x20xbf16>
    %c0_1 = arith.constant 0 : index
    %c0_2 = arith.constant 0 : index
    %1 = vector.load %arg0[%c0_1, %c0_2] : memref<20x120xbf16, #tpu.memory_space<vmem>>, vector<20x120xbf16>
    %cst = arith.constant dense<0.000000e+00> : vector<8x120xf32>
    %2 = tpu.matmul %0, %1, %cst {dimension_numbers = #tpu.dot_dimension_numbers<[1], [0], [0], [1], [0, 0, 1, 1], [], []>} : vector<8x20xbf16>, vector<20x120xbf16>, vector<8x120xf32> -> vector<8x120xf32>
    %cst_3 = arith.constant dense<0.000000e+00> : vector<8xf32>
    %3 = vector.multi_reduction <add>, %2, %cst_3 [1] : vector<8x120xf32> to vector<8xf32>
    %4 = vector.shape_cast %3 : vector<8xf32> to vector<8x1xf32>
    %cst_4 = arith.constant 0.00833333377 : f32
    %5 = vector.broadcast %cst_4 : f32 to vector<8x1xf32>
    %6 = arith.mulf %4, %5 : vector<8x1xf32>
    %7 = arith.mulf %2, %2 : vector<8x120xf32>
    %cst_5 = arith.constant dense<0.000000e+00> : vector<8xf32>
    %8 = vector.multi_reduction <add>, %7, %cst_5 [1] : vector<8x120xf32> to vector<8xf32>
    %9 = vector.shape_cast %8 : vector<8xf32> to vector<8x1xf32>
    %cst_6 = arith.constant 0.00833333377 : f32
    %10 = vector.broadcast %cst_6 : f32 to vector<8x1xf32>
    %11 = arith.mulf %9, %10 : vector<8x1xf32>
    %12 = arith.mulf %6, %6 : vector<8x1xf32>
    %13 = arith.subf %11, %12 : vector<8x1xf32>
    %cst_7 = arith.constant 9.99999974E-6 : f32
    %14 = vector.broadcast %cst_7 : f32 to vector<8x1xf32>
    %15 = arith.addf %13, %14 : vector<8x1xf32>
    %16 = math.rsqrt %15 : vector<8x1xf32>
    %c0_8 = arith.constant 0 : index
    %c0_9 = arith.constant 0 : index
    %17 = vector.load %arg2[%c0_8, %c0_9] : memref<8x1xf32, #tpu.memory_space<vmem>>, vector<8x1xf32>
    %18 = arith.mulf %16, %17 : vector<8x1xf32>
    %19 = vector.broadcast %6 : vector<8x1xf32> to vector<8x120xf32>
    %20 = arith.subf %2, %19 : vector<8x120xf32>
    %21 = vector.broadcast %18 : vector<8x1xf32> to vector<8x120xf32>
    %22 = arith.mulf %20, %21 : vector<8x120xf32>
    %c0_10 = arith.constant 0 : index
    %c0_11 = arith.constant 0 : index
    %23 = vector.load %arg3[%c0_10, %c0_11] : memref<8x1xf32, #tpu.memory_space<vmem>>, vector<8x1xf32>
    %24 = vector.broadcast %23 : vector<8x1xf32> to vector<8x120xf32>
    %25 = arith.addf %22, %24 : vector<8x120xf32>
    %cst_12 = arith.constant 0.000000e+00 : f32
    %26 = vector.broadcast %cst_12 : f32 to vector<8x120xf32>
    %27 = arith.maximumf %25, %26 : vector<8x120xf32>
    %c0_13 = arith.constant 0 : index
    %c0_14 = arith.constant 0 : index
    %28 = vector.load %arg4[%c0_13, %c0_14] : memref<8x120xf32, #tpu.memory_space<vmem>>, vector<8x120xf32>
    tpu.vector_store %arg4[%c0_13, %c0_14], %27 {strides = array<i32>} : memref<8x120xf32, #tpu.memory_space<vmem>>, vector<8x120xf32>,
    return
  }
}

module attributes {stable_mosaic.version = 11 : i64} {
  func.func @_conv_bn_relu_kernel(%arg0: memref<24x56xbf16, #tpu.memory_space<vmem>>, %arg1: memref<16x24xbf16, #tpu.memory_space<vmem>>, %arg2: memref<16x1xf32, #tpu.memory_space<vmem>>, %arg3: memref<16x1xf32, #tpu.memory_space<vmem>>, %arg4: memref<16x56xf32, #tpu.memory_space<vmem>>) attributes {dimension_semantics = [], scalar_prefetch = 0 : i64, scratch_operands = 0 : i64, tpu.core_type = #tpu.core_type<tc>} {
    %c0 = arith.constant 0 : index
    %c0_0 = arith.constant 0 : index
    %0 = vector.load %arg1[%c0, %c0_0] : memref<16x24xbf16, #tpu.memory_space<vmem>>, vector<16x24xbf16>
    %c0_1 = arith.constant 0 : index
    %c0_2 = arith.constant 0 : index
    %1 = vector.load %arg0[%c0_1, %c0_2] : memref<24x56xbf16, #tpu.memory_space<vmem>>, vector<24x56xbf16>
    %cst = arith.constant dense<0.000000e+00> : vector<16x56xf32>
    %2 = tpu.matmul %0, %1, %cst {dimension_numbers = #tpu.dot_dimension_numbers<[1], [0], [0], [1], [0, 0, 1, 1], [], []>} : vector<16x24xbf16>, vector<24x56xbf16>, vector<16x56xf32> -> vector<16x56xf32>
    %cst_3 = arith.constant dense<0.000000e+00> : vector<16xf32>
    %3 = vector.multi_reduction <add>, %2, %cst_3 [1] : vector<16x56xf32> to vector<16xf32>
    %4 = vector.shape_cast %3 : vector<16xf32> to vector<16x1xf32>
    %cst_4 = arith.constant 0.0178571437 : f32
    %5 = vector.broadcast %cst_4 : f32 to vector<16x1xf32>
    %6 = arith.mulf %4, %5 : vector<16x1xf32>
    %7 = arith.mulf %2, %2 : vector<16x56xf32>
    %cst_5 = arith.constant dense<0.000000e+00> : vector<16xf32>
    %8 = vector.multi_reduction <add>, %7, %cst_5 [1] : vector<16x56xf32> to vector<16xf32>
    %9 = vector.shape_cast %8 : vector<16xf32> to vector<16x1xf32>
    %cst_6 = arith.constant 0.0178571437 : f32
    %10 = vector.broadcast %cst_6 : f32 to vector<16x1xf32>
    %11 = arith.mulf %9, %10 : vector<16x1xf32>
    %12 = arith.mulf %6, %6 : vector<16x1xf32>
    %13 = arith.subf %11, %12 : vector<16x1xf32>
    %cst_7 = arith.constant 9.99999974E-6 : f32
    %14 = vector.broadcast %cst_7 : f32 to vector<16x1xf32>
    %15 = arith.addf %13, %14 : vector<16x1xf32>
    %16 = math.rsqrt %15 : vector<16x1xf32>
    %c0_8 = arith.constant 0 : index
    %c0_9 = arith.constant 0 : index
    %17 = vector.load %arg2[%c0_8, %c0_9] : memref<16x1xf32, #tpu.memory_space<vmem>>, vector<16x1xf32>
    %18 = arith.mulf %16, %17 : vector<16x1xf32>
    %19 = vector.broadcast %6 : vector<16x1xf32> to vector<16x56xf32>
    %20 = arith.subf %2, %19 : vector<16x56xf32>
    %21 = vector.broadcast %18 : vector<16x1xf32> to vector<16x56xf32>
    %22 = arith.mulf %20, %21 : vector<16x56xf32>
    %c0_10 = arith.constant 0 : index
    %c0_11 = arith.constant 0 : index
    %23 = vector.load %arg3[%c0_10, %c0_11] : memref<16x1xf32, #tpu.memory_space<vmem>>, vector<16x1xf32>
    %24 = vector.broadcast %23 : vector<16x1xf32> to vector<16x56xf32>
    %25 = arith.addf %22, %24 : vector<16x56xf32>
    %cst_12 = arith.constant 0.000000e+00 : f32
    %26 = vector.broadcast %cst_12 : f32 to vector<16x56xf32>
    %27 = arith.maximumf %25, %26 : vector<16x56xf32>
    %c0_13 = arith.constant 0 : index
    %c0_14 = arith.constant 0 : index
    %28 = vector.load %arg4[%c0_13, %c0_14] : memref<16x56xf32, #tpu.memory_space<vmem>>, vector<16x56xf32>
    tpu.vector_store %arg4[%c0_13, %c0_14], %27 {strides = array<i32>} : memref<16x56xf32, #tpu.memory_space<vmem>>, vector<16x56xf32>,
    return
  }
}

module attributes {stable_mosaic.version = 11 : i64} {
  func.func @_mlp_head_kernel(%arg0: memref<2x224xbf16, #tpu.memory_space<vmem>>, %arg1: memref<224x32xbf16, #tpu.memory_space<vmem>>, %arg2: memref<1x32xf32, #tpu.memory_space<vmem>>, %arg3: memref<32x10xbf16, #tpu.memory_space<vmem>>, %arg4: memref<1x10xf32, #tpu.memory_space<vmem>>, %arg5: memref<2x10xf32, #tpu.memory_space<vmem>>) attributes {dimension_semantics = [], scalar_prefetch = 0 : i64, scratch_operands = 0 : i64, tpu.core_type = #tpu.core_type<tc>} {
    %c0 = arith.constant 0 : index
    %c0_0 = arith.constant 0 : index
    %0 = vector.load %arg0[%c0, %c0_0] : memref<2x224xbf16, #tpu.memory_space<vmem>>, vector<2x224xbf16>
    %c0_1 = arith.constant 0 : index
    %c0_2 = arith.constant 0 : index
    %1 = vector.load %arg1[%c0_1, %c0_2] : memref<224x32xbf16, #tpu.memory_space<vmem>>, vector<224x32xbf16>
    %cst = arith.constant dense<0.000000e+00> : vector<2x32xf32>
    %2 = tpu.matmul %0, %1, %cst {dimension_numbers = #tpu.dot_dimension_numbers<[1], [0], [0], [1], [0, 0, 1, 1], [], []>} : vector<2x224xbf16>, vector<224x32xbf16>, vector<2x32xf32> -> vector<2x32xf32>
    %c0_3 = arith.constant 0 : index
    %c0_4 = arith.constant 0 : index
    %3 = vector.load %arg2[%c0_3, %c0_4] : memref<1x32xf32, #tpu.memory_space<vmem>>, vector<1x32xf32>
    %4 = vector.broadcast %3 : vector<1x32xf32> to vector<2x32xf32>
    %5 = arith.addf %2, %4 : vector<2x32xf32>
    %cst_5 = arith.constant 0.000000e+00 : f32
    %6 = vector.broadcast %cst_5 : f32 to vector<2x32xf32>
    %7 = arith.maximumf %5, %6 : vector<2x32xf32>
    %8 = arith.truncf %7 : vector<2x32xf32> to vector<2x32xbf16>
    %c0_6 = arith.constant 0 : index
    %c0_7 = arith.constant 0 : index
    %9 = vector.load %arg3[%c0_6, %c0_7] : memref<32x10xbf16, #tpu.memory_space<vmem>>, vector<32x10xbf16>
    %cst_8 = arith.constant dense<0.000000e+00> : vector<2x10xf32>
    %10 = tpu.matmul %8, %9, %cst_8 {dimension_numbers = #tpu.dot_dimension_numbers<[1], [0], [0], [1], [0, 0, 1, 1], [], []>} : vector<2x32xbf16>, vector<32x10xbf16>, vector<2x10xf32> -> vector<2x10xf32>
    %c0_9 = arith.constant 0 : index
    %c0_10 = arith.constant 0 : index
    %11 = vector.load %arg4[%c0_9, %c0_10] : memref<1x10xf32, #tpu.memory_space<vmem>>, vector<1x10xf32>
    %12 = vector.broadcast %11 : vector<1x10xf32> to vector<2x10xf32>
    %13 = arith.addf %10, %12 : vector<2x10xf32>
    %cst_11 = arith.constant dense<0xFF800000> : vector<2xf32>
    %14 = vector.multi_reduction <maximumf>, %13, %cst_11 [1] : vector<2x10xf32> to vector<2xf32>
    %15 = vector.shape_cast %14 : vector<2xf32> to vector<2x1xf32>
    %16 = vector.broadcast %15 : vector<2x1xf32> to vector<2x10xf32>
    %17 = arith.subf %13, %16 : vector<2x10xf32>
    %18 = math.exp %17 : vector<2x10xf32>
    %cst_12 = arith.constant dense<0.000000e+00> : vector<2xf32>
    %19 = vector.multi_reduction <add>, %18, %cst_12 [1] : vector<2x10xf32> to vector<2xf32>
    %20 = vector.shape_cast %19 : vector<2xf32> to vector<2x1xf32>
    %21 = math.log %20 : vector<2x1xf32>
    %22 = vector.broadcast %21 : vector<2x1xf32> to vector<2x10xf32>
    %23 = arith.subf %17, %22 : vector<2x10xf32>
    %c0_13 = arith.constant 0 : index
    %c0_14 = arith.constant 0 : index
    %24 = vector.load %arg5[%c0_13, %c0_14] : memref<2x10xf32, #tpu.memory_space<vmem>>, vector<2x10xf32>
    tpu.vector_store %arg5[%c0_13, %c0_14], %23 {strides = array<i32>} : memref<2x10xf32, #tpu.memory_space<vmem>>, vector<2x10xf32>,
    return
  }
}

</mosaic_0001>

<llo_original>
// kernel: cnn1d_forward.3
$region0: #{cnn1d_forward.3}
  #allocation0 [shape = 'u32[]', space=smem, size = 0x4, offset = 0x4, fixed_abs, tag = 'smem constant byte address 0x4 - core index']
  #allocation1 [shape = 'u32[72,128]{1,0:T(1,128)}', space=vmem, size = 0x9000, scoped, tag = 'internal scratch']
  %s0 = inlined_call_operand.vmem [shape: bf16[20,120], index: 0, kind: input, shape index: {}]
  %s1 = inlined_call_operand.vmem [shape: bf16[8,20], index: 1, kind: input, shape index: {}]
  %s2 = inlined_call_operand.vmem [shape: f32[8,1], index: 2, kind: input, shape index: {}]
  %s3 = inlined_call_operand.vmem [shape: f32[8,1], index: 3, kind: input, shape index: {}]
  %s4 = inlined_call_operand.vmem [shape: f32[8,120], index: 4, kind: output, shape index: {}]
  %s5 = sld [smem:[#allocation0]]
  $region26: #{cnn1d_forward.3} parent=0
    _
  %s7 = ssub.s32 1, %s5
  %s8 = scalar_select 0, %s7, %s5
  // Predicated region
  $region2: #{cnn1d_forward.3} parent=0 // pred_check
    _
  $region3: #{cnn1d_forward.3} parent=0 // pred_check_branch
    %10 = sbr.rel (0) target = $region5
  $region4: #{cnn1d_forward.3} parent=0 // pred_region
    _
  $region5: #{cnn1d_forward.3} parent=0 // pred_fallthru
    _
  // Predicated region
  $region6: #{cnn1d_forward.3} parent=0 // pred_check
    _
  $region7: #{cnn1d_forward.3} parent=0 // pred_check_branch
    %12 = sbr.rel (0) target = $region9
  $region8: #{cnn1d_forward.3} parent=0 // pred_region
    _
  $region9: #{cnn1d_forward.3} parent=0 // pred_fallthru
    _
  // Predicated region
  $region10: #{cnn1d_forward.3} parent=0 // pred_check
    _
  $region11: #{cnn1d_forward.3} parent=0 // pred_check_branch
    %14 = sbr.rel (0) target = $region13
  $region12: #{cnn1d_forward.3} parent=0 // pred_region
    _
  $region13: #{cnn1d_forward.3} parent=0 // pred_fallthru
    _
  // Predicated region
  $region14: #{cnn1d_forward.3} parent=0 // pred_check
    _
  $region15: #{cnn1d_forward.3} parent=0 // pred_check_branch
    %16 = sbr.rel (0) target = $region17
  $region16: #{cnn1d_forward.3} parent=0 // pred_region
    _
  $region17: #{cnn1d_forward.3} parent=0 // pred_fallthru
    _
  %v18 = vld [vmem:[%s1] sm:$0xf]
  %v19 = vld [vmem:[%s0] sm:$0xf]
  %v20 = vld [vmem:[%s0 + $0x4] sm:$0xf]
  %v21 = vld [vmem:[%s0 + $0x8] sm:$0x3]
  %v25 = vunpack.c.l.b16 %v19
  %v26 = vunpack.c.l.b16 %v20
  %v27 = vunpack.c.l.b16 %v21
  %v28 = vpack.c.b16 %v26, %v25
  %v29 = vpack.c.b16 %v27, %v27
  %vm31 = vcmask 162816
  %v33 = vsel %vm31, %v18, 0
  %vm35 = vcmask 1041408
  %v37 = vsel %vm35, %v29, 0
  %39 = vmatpush.bf16.msra.mxu0 0
  %40 = vmatpush.bf16.msra.mxu0 0
  %41 = vmatpush.bf16.msra.mxu0 0
  %42 = vmatpush.bf16.msra.mxu0 0
  %43 = vmatpush.bf16.msra.mxu0 0
  %44 = vmatpush.bf16.msra.mxu0 0
  %45 = vmatpush.bf16.msra.mxu0 %v37
  %46 = vmatpush.bf16.msra.mxu0 %v28
  %47 = vmatmul.bf16.gmra.mxu0 %v33
  %v48 = vpop.f32.mrf.mxu0
  %v49 = vadd.f32 0.0, %v48
  %v50 = vpop.f32.mrf.mxu0
  %51 = vdwg.mxu0
  %vm52 = vcmask 982016
  %v53 = vsel %vm52, %v49, 0.0
  %54 = vadd.xlane.f32.xlu0 %v53
  %v55 = vpop.xlane.xlu0 %54
  %v56 = vmul.f32 %v55, 0.008333334
  %v57 = vmul.f32 %v49, %v49
  %v58 = vsel %vm52, %v57, 0.0
  %59 = vadd.xlane.f32.xlu0 %v58
  %v60 = vpop.xlane.xlu0 %59
  %v61 = vmul.f32 %v60, 0.008333334
  %v62 = vmul.f32 %v56, %v56
  %v63 = vsub.f32 %v61, %v62
  %v64 = vadd.f32 %v63, 1e-05
  %v65 = vrsqrt.pop %v64
  %v66 = vmul.f32 %v65, %v64
  %v67 = vmul.f32 %v66, %v65
  %v68 = vmul.f32 0.5, %v67
  %v69 = vsub.f32 1.5, %v68
  %v70 = vmul.f32 %v65, %v69
  %vm71 = vweird.f32 %v64
  %vm72 = vweird.f32 %v65
  %vm73 = vmor %vm71, %vm72
  %v74 = vsel %vm73, %v65, %v70
  %v75 = vld [vmem:[%s2] sm:$0xff]
  %v76 = vmul.f32 %v74, %v75
  %v77 = vsub.f32 %v49, %v56
  %79 = vset.pattern.permute.xlu0 0
  %80 = vperm.xlu0 %79, %v76
  %v81 = vpop.permute.xlu0 %80
  %v83 = vmul.f32 %v77, %v81
  %v84 = vld [vmem:[%s3] sm:$0xff]
  %86 = vset.pattern.permute.xlu0 0
  %87 = vperm.xlu0 %86, %v84
  %v88 = vpop.permute.xlu0 %87
  %v90 = vadd.f32 %v83, %v88
  %v91 = vmax.f32 %v90, 0.0
  %92 = vst.msk [vmem:[%s4] sm:$0xff] %vm52, %v91
  // Predicated region
  $region18: #{cnn1d_forward.3} parent=0 // pred_check
    _
  $region19: #{cnn1d_forward.3} parent=0 // pred_check_branch
    %94 = sbr.rel (0) target = $region21
  $region20: #{cnn1d_forward.3} parent=0 // pred_region
    _
  $region21: #{cnn1d_forward.3} parent=0 // pred_fallthru
    _
  // Predicated region
  $region22: #{cnn1d_forward.3} parent=0 // pred_check
    _
  $region23: #{cnn1d_forward.3} parent=0 // pred_check_branch
    %96 = sbr.rel (0) target = $region25
  $region24: #{cnn1d_forward.3} parent=0 // pred_region
    _
  $region25: #{cnn1d_forward.3} parent=0 // pred_fallthru
    _

// kernel: cnn1d_forward.4
$region0: #{cnn1d_forward.4}
  #allocation0 [shape = 'u32[]', space=smem, size = 0x4, offset = 0x4, fixed_abs, tag = 'smem constant byte address 0x4 - core index']
  #allocation1 [shape = 'u32[72,128]{1,0:T(1,128)}', space=vmem, size = 0x9000, scoped, tag = 'internal scratch']
  %s0 = inlined_call_operand.vmem [shape: bf16[24,56], index: 0, kind: input, shape index: {}]
  %s1 = inlined_call_operand.vmem [shape: bf16[16,24], index: 1, kind: input, shape index: {}]
  %s2 = inlined_call_operand.vmem [shape: f32[16,1], index: 2, kind: input, shape index: {}]
  %s3 = inlined_call_operand.vmem [shape: f32[16,1], index: 3, kind: input, shape index: {}]
  %s4 = inlined_call_operand.vmem [shape: f32[16,56], index: 4, kind: output, shape index: {}]
  %s5 = sld [smem:[#allocation0]]
  $region26: #{cnn1d_forward.4} parent=0
    _
  %s7 = ssub.s32 1, %s5
  %s8 = scalar_select 0, %s7, %s5
  // Predicated region
  $region2: #{cnn1d_forward.4} parent=0 // pred_check
    _
  $region3: #{cnn1d_forward.4} parent=0 // pred_check_branch
    %10 = sbr.rel (0) target = $region5
  $region4: #{cnn1d_forward.4} parent=0 // pred_region
    _
  $region5: #{cnn1d_forward.4} parent=0 // pred_fallthru
    _
  // Predicated region
  $region6: #{cnn1d_forward.4} parent=0 // pred_check
    _
  $region7: #{cnn1d_forward.4} parent=0 // pred_check_branch
    %12 = sbr.rel (0) target = $region9
  $region8: #{cnn1d_forward.4} parent=0 // pred_region
    _
  $region9: #{cnn1d_forward.4} parent=0 // pred_fallthru
    _
  // Predicated region
  $region10: #{cnn1d_forward.4} parent=0 // pred_check
    _
  $region11: #{cnn1d_forward.4} parent=0 // pred_check_branch
    %14 = sbr.rel (0) target = $region13
  $region12: #{cnn1d_forward.4} parent=0 // pred_region
    _
  $region13: #{cnn1d_forward.4} parent=0 // pred_fallthru
    _
  // Predicated region
  $region14: #{cnn1d_forward.4} parent=0 // pred_check
    _
  $region15: #{cnn1d_forward.4} parent=0 // pred_check_branch
    %16 = sbr.rel (0) target = $region17
  $region16: #{cnn1d_forward.4} parent=0 // pred_region
    _
  $region17: #{cnn1d_forward.4} parent=0 // pred_fallthru
    _
  %v18 = vld [vmem:[%s1] sm:$0xf]
  %v19 = vld [vmem:[%s1 + $0x4] sm:$0xf]
  %v20 = vld [vmem:[%s0] sm:$0xf]
  %v21 = vld [vmem:[%s0 + $0x4] sm:$0xf]
  %v22 = vld [vmem:[%s0 + $0x8] sm:$0xf]
  %v25 = vunpack.c.l.b16 %v18
  %v26 = vunpack.c.l.b16 %v19
  %v27 = vpack.c.b16 %v26, %v25
  %v31 = vunpack.c.l.b16 %v20
  %v32 = vunpack.c.l.b16 %v21
  %v33 = vunpack.c.l.b16 %v22
  %v34 = vpack.c.b16 %v32, %v31
  %v35 = vpack.c.b16 %v33, %v33
  %vm37 = vcmask 195584
  %v39 = vsel %vm37, %v27, 0
  %vm41 = vcmask 1043456
  %v43 = vsel %vm41, %v35, 0
  %45 = vmatpush.bf16.msra.mxu0 0
  %46 = vmatpush.bf16.msra.mxu0 0
  %47 = vmatpush.bf16.msra.mxu0 0
  %48 = vmatpush.bf16.msra.mxu0 0
  %49 = vmatpush.bf16.msra.mxu0 0
  %50 = vmatpush.bf16.msra.mxu0 0
  %51 = vmatpush.bf16.msra.mxu0 %v43
  %52 = vmatpush.bf16.msra.mxu0 %v34
  %53 = vmatmul.bf16.gmra.mxu0 %v39
  %v54 = vpop.f32.mrf.mxu0
  %v55 = vadd.f32 0.0, %v54
  %v56 = vpop.f32.mrf.mxu0
  %v57 = vadd.f32 0.0, %v56
  %58 = vdwg.mxu0
  %vm59 = vcmask 457728
  %v60 = vsel %vm59, %v55, 0.0
  %61 = vadd.xlane.f32.xlu0 %v60
  %v62 = vpop.xlane.xlu0 %61
  %v63 = vsel %vm59, %v57, 0.0
  %64 = vadd.xlane.f32.xlu0 %v63
  %v65 = vpop.xlane.xlu0 %64
  %v66 = vmul.f32 %v62, 0.017857144
  %v67 = vmul.f32 %v65, 0.017857144
  %v68 = vmul.f32 %v55, %v55
  %v69 = vmul.f32 %v57, %v57
  %v70 = vsel %vm59, %v68, 0.0
  %71 = vadd.xlane.f32.xlu0 %v70
  %v72 = vpop.xlane.xlu0 %71
  %v73 = vsel %vm59, %v69, 0.0
  %74 = vadd.xlane.f32.xlu0 %v73
  %v75 = vpop.xlane.xlu0 %74
  %v76 = vmul.f32 %v72, 0.017857144
  %v77 = vmul.f32 %v75, 0.017857144
  %v78 = vmul.f32 %v66, %v66
  %v79 = vmul.f32 %v67, %v67
  %v80 = vsub.f32 %v76, %v78
  %v81 = vsub.f32 %v77, %v79
  %v82 = vadd.f32 %v80, 1e-05
  %v83 = vadd.f32 %v81, 1e-05
  %v84 = vrsqrt.pop %v82
  %v85 = vmul.f32 %v84, %v82
  %v86 = vmul.f32 %v85, %v84
  %v87 = vmul.f32 0.5, %v86
  %v88 = vsub.f32 1.5, %v87
  %v89 = vmul.f32 %v84, %v88
  %vm90 = vweird.f32 %v82
  %vm91 = vweird.f32 %v84
  %vm92 = vmor %vm90, %vm91
  %v93 = vsel %vm92, %v84, %v89
  %v94 = vrsqrt.pop %v83
  %v95 = vmul.f32 %v94, %v83
  %v96 = vmul.f32 %v95, %v94
  %v97 = vmul.f32 0.5, %v96
  %v98 = vsub.f32 1.5, %v97
  %v99 = vmul.f32 %v94, %v98
  %vm100 = vweird.f32 %v83
  %vm101 = vweird.f32 %v94
  %vm102 = vmor %vm100, %vm101
  %v103 = vsel %vm102, %v94, %v99
  %v104 = vld [vmem:[%s2] sm:$0xff]
  %v105 = vld [vmem:[%s2 + $0x8] sm:$0xff]
  %v106 = vmul.f32 %v93, %v104
  %v107 = vmul.f32 %v103, %v105
  %v108 = vsub.f32 %v55, %v66
  %v109 = vsub.f32 %v57, %v67
  %111 = vset.pattern.permute.xlu0 0
  %112 = vperm.xlu0 %111, %v106
  %v113 = vpop.permute.xlu0 %112
  %116 = vset.pattern.permute.xlu0 0
  %117 = vperm.xlu0 %116, %v107
  %v118 = vpop.permute.xlu0 %117
  %v120 = vmul.f32 %v108, %v113
  %v121 = vmul.f32 %v109, %v118
  %v122 = vld [vmem:[%s3] sm:$0xff]
  %v123 = vld [vmem:[%s3 + $0x8] sm:$0xff]
  %125 = vset.pattern.permute.xlu0 0
  %126 = vperm.xlu0 %125, %v122
  %v127 = vpop.permute.xlu0 %126
  %130 = vset.pattern.permute.xlu0 0
  %131 = vperm.xlu0 %130, %v123
  %v132 = vpop.permute.xlu0 %131
  %v134 = vadd.f32 %v120, %v127
  %v135 = vadd.f32 %v121, %v132
  %v136 = vmax.f32 %v134, 0.0
  %v137 = vmax.f32 %v135, 0.0
  %138 = vst.msk [vmem:[%s4] sm:$0xff] %vm59, %v136
  %139 = vst.msk [vmem:[%s4 + $0x8] sm:$0xff] %vm59, %v137
  // Predicated region
  $region18: #{cnn1d_forward.4} parent=0 // pred_check
    _
  $region19: #{cnn1d_forward.4} parent=0 // pred_check_branch
    %141 = sbr.rel (0) target = $region21
  $region20: #{cnn1d_forward.4} parent=0 // pred_region
    _
  $region21: #{cnn1d_forward.4} parent=0 // pred_fallthru
    _
  // Predicated region
  $region22: #{cnn1d_forward.4} parent=0 // pred_check
    _
  $region23: #{cnn1d_forward.4} parent=0 // pred_check_branch
    %143 = sbr.rel (0) target = $region25
  $region24: #{cnn1d_forward.4} parent=0 // pred_region
    _
  $region25: #{cnn1d_forward.4} parent=0 // pred_fallthru
    _

// kernel: cnn1d_forward.5
$region0: #{cnn1d_forward.5}
  #allocation0 [shape = 'u32[]', space=smem, size = 0x4, offset = 0x4, fixed_abs, tag = 'smem constant byte address 0x4 - core index']
  #allocation1 [shape = 'u32[72,128]{1,0:T(1,128)}', space=vmem, size = 0x9000, scoped, tag = 'internal scratch']
  %s0 = inlined_call_operand.vmem [shape: bf16[2,224], index: 0, kind: input, shape index: {}]
  %s1 = inlined_call_operand.vmem [shape: bf16[224,32], index: 1, kind: input, shape index: {}]
  %s2 = inlined_call_operand.vmem [shape: f32[1,32], index: 2, kind: input, shape index: {}]
  %s3 = inlined_call_operand.vmem [shape: bf16[32,10], index: 3, kind: input, shape index: {}]
  %s4 = inlined_call_operand.vmem [shape: f32[1,10], index: 4, kind: input, shape index: {}]
  %s5 = inlined_call_operand.hbm [shape: f32[2,10], index: 5, kind: output, shape index: {}]
  %s6 = sld [smem:[#allocation0]]
  $region30: #{cnn1d_forward.5} parent=0
    _
  %s8 = ssub.s32 1, %s6
  %s9 = scalar_select 0, %s8, %s6
  $region1: #{cnn1d_forward.5} parent=0
    #allocation2 [shape = 'u8[1024]{0}', space=vmem, size = 0x400, scoped, tag = 'output window, operand 0, single buffered']
    #allocation3 [shape = 's32[1]{0}', space=sflag, size = 0x4, scoped, tag = 'scoped memory for cnn1d_forward.5']
    %10 = vsyncpa [#allocation3], 0
    // Predicated region
    $region2: #{cnn1d_forward.5} parent=1 // pred_check
      _
    $region3: #{cnn1d_forward.5} parent=1 // pred_check_branch
      %12 = sbr.rel (0) target = $region5
    $region4: #{cnn1d_forward.5} parent=1 // pred_region
      _
    $region5: #{cnn1d_forward.5} parent=1 // pred_fallthru
      _
    // Predicated region
    $region6: #{cnn1d_forward.5} parent=1 // pred_check
      _
    $region7: #{cnn1d_forward.5} parent=1 // pred_check_branch
      %14 = sbr.rel (0) target = $region9
    $region8: #{cnn1d_forward.5} parent=1 // pred_region
      _
    $region9: #{cnn1d_forward.5} parent=1 // pred_fallthru
      _
    // Predicated region
    $region10: #{cnn1d_forward.5} parent=1 // pred_check
      _
    $region11: #{cnn1d_forward.5} parent=1 // pred_check_branch
      %16 = sbr.rel (0) target = $region13
    $region12: #{cnn1d_forward.5} parent=1 // pred_region
      _
    $region13: #{cnn1d_forward.5} parent=1 // pred_fallthru
      _
    // Predicated region
    $region14: #{cnn1d_forward.5} parent=1 // pred_check
      _
    $region15: #{cnn1d_forward.5} parent=1 // pred_check_branch
      %18 = sbr.rel (0) target = $region17
    $region16: #{cnn1d_forward.5} parent=1 // pred_region
      _
    $region17: #{cnn1d_forward.5} parent=1 // pred_fallthru
      _
    // Predicated region
    $region18: #{cnn1d_forward.5} parent=1 // pred_check
      _
    $region19: #{cnn1d_forward.5} parent=1 // pred_check_branch
      %20 = sbr.rel (0) target = $region21
    $region20: #{cnn1d_forward.5} parent=1 // pred_region
      _
    $region21: #{cnn1d_forward.5} parent=1 // pred_fallthru
      _
    %v22 = vld [vmem:[%s0] sm:$0x3]
    %v23 = vld [vmem:[%s1] sm:$0xf]
    %v24 = vld [vmem:[%s1 + $0x4] sm:$0xf]
    %v25 = vld [vmem:[%s1 + $0x8] sm:$0xf]
    %v26 = vld [vmem:[%s1 + $0xc] sm:$0xf]
    %v27 = vld [vmem:[%s1 + $0x10] sm:$0xf]
    %v28 = vld [vmem:[%s1 + $0x14] sm:$0xf]
    %v29 = vld [vmem:[%s1 + $0x18] sm:$0xf]
    %v30 = vld [vmem:[%s1 + $0x1c] sm:$0xf]
    %v31 = vld [vmem:[%s1 + $0x20] sm:$0xf]
    %v32 = vld [vmem:[%s1 + $0x24] sm:$0xf]
    %v33 = vld [vmem:[%s1 + $0x28] sm:$0xf]
    %v34 = vld [vmem:[%s1 + $0x2c] sm:$0xf]
    %v35 = vld [vmem:[%s1 + $0x30] sm:$0xf]
    %v36 = vld [vmem:[%s1 + $0x34] sm:$0xf]
    %v37 = vld [vmem:[%s1 + $0x38] sm:$0xf]
    %v38 = vld [vmem:[%s1 + $0x3c] sm:$0xf]
    %v39 = vld [vmem:[%s1 + $0x40] sm:$0xf]
    %v40 = vld [vmem:[%s1 + $0x44] sm:$0xf]
    %v41 = vld [vmem:[%s1 + $0x48] sm:$0xf]
    %v42 = vld [vmem:[%s1 + $0x4c] sm:$0xf]
    %v43 = vld [vmem:[%s1 + $0x50] sm:$0xf]
    %v44 = vld [vmem:[%s1 + $0x54] sm:$0xf]
    %v45 = vld [vmem:[%s1 + $0x58] sm:$0xf]
    %v46 = vld [vmem:[%s1 + $0x5c] sm:$0xf]
    %v47 = vld [vmem:[%s1 + $0x60] sm:$0xf]
    %v48 = vld [vmem:[%s1 + $0x64] sm:$0xf]
    %v49 = vld [vmem:[%s1 + $0x68] sm:$0xf]
    %v50 = vld [vmem:[%s1 + $0x6c] sm:$0xf]
    %v51 = vld [vmem:[%s2] sm:$0x1]
    %v53 = vperm.slane %v51, 0
    %56 = vst [vmem:[#allocation1] ss:$9 sm:$0xff] %v22
    %v57 = vld [vmem:[#allocation1] sm:$0xff]
    %v58 = vld [vmem:[#allocation1 + $0x9] sm:$0xff]
    %v88 = vunpack.c.l.b16 %v23
    %v89 = vunpack.c.l.b16 %v24
    %v90 = vunpack.c.l.b16 %v25
    %v91 = vunpack.c.l.b16 %v26
    %v92 = vunpack.c.l.b16 %v27
    %v93 = vunpack.c.l.b16 %v28
    %v94 = vunpack.c.l.b16 %v29
    %v95 = vunpack.c.l.b16 %v30
    %v96 = vunpack.c.l.b16 %v31
    %v97 = vunpack.c.l.b16 %v32
    %v98 = vunpack.c.l.b16 %v33
    %v99 = vunpack.c.l.b16 %v34
    %v100 = vunpack.c.l.b16 %v35
    %v101 = vunpack.c.l.b16 %v36
    %v102 = vunpack.c.l.b16 %v37
    %v103 = vunpack.c.l.b16 %v38
    %v104 = vunpack.c.l.b16 %v39
    %v105 = vunpack.c.l.b16 %v40
    %v106 = vunpack.c.l.b16 %v41
    %v107 = vunpack.c.l.b16 %v42
    %v108 = vunpack.c.l.b16 %v43
    %v109 = vunpack.c.l.b16 %v44
    %v110 = vunpack.c.l.b16 %v45
    %v111 = vunpack.c.l.b16 %v46
    %v112 = vunpack.c.l.b16 %v47
    %v113 = vunpack.c.l.b16 %v48
    %v114 = vunpack.c.l.b16 %v49
    %v115 = vunpack.c.l.b16 %v50
    %v116 = vpack.c.b16 %v89, %v88
    %v117 = vpack.c.b16 %v91, %v90
    %v118 = vpack.c.b16 %v93, %v92
    %v119 = vpack.c.b16 %v95, %v94
    %v120 = vpack.c.b16 %v97, %v96
    %v121 = vpack.c.b16 %v99, %v98
    %v122 = vpack.c.b16 %v101, %v100
    %v123 = vpack.c.b16 %v103, %v102
    %v124 = vpack.c.b16 %v105, %v104
    %v125 = vpack.c.b16 %v107, %v106
    %v126 = vpack.c.b16 %v109, %v108
    %v127 = vpack.c.b16 %v111, %v110
    %v128 = vpack.c.b16 %v113, %v112
    %v129 = vpack.c.b16 %v115, %v114
    %vm144 = vcmask 785408
    %v145 = vsel %vm144, %v58, 0
    %147 = vmatpush.bf16.msra.mxu0 %v123
    %148 = vmatpush.bf16.msra.mxu0 %v122
    %149 = vmatpush.bf16.msra.mxu0 %v121
    %150 = vmatpush.bf16.msra.mxu0 %v120
    %151 = vmatpush.bf16.msra.mxu0 %v119
    %152 = vmatpush.bf16.msra.mxu0 %v118
    %153 = vmatpush.bf16.msra.mxu0 %v117
    %154 = vmatpush.bf16.msra.mxu0 %v116
    %155 = vmatmul.bf16.gmra.mxu0 %v57
    %v156 = vpop.f32.mrf.mxu0
    %v157 = vadd.f32 %v53, %v156
    %v158 = vpop.f32.mrf.mxu0
    %159 = vdwg.mxu0
    %160 = vmatpush.bf16.msra.mxu0 0
    %161 = vmatpush.bf16.msra.mxu0 0
    %162 = vmatpush.bf16.msra.mxu0 %v129
    %163 = vmatpush.bf16.msra.mxu0 %v128
    %164 = vmatpush.bf16.msra.mxu0 %v127
    %165 = vmatpush.bf16.msra.mxu0 %v126
    %166 = vmatpush.bf16.msra.mxu0 %v125
    %167 = vmatpush.bf16.msra.mxu0 %v124
    %168 = vmatmul.bf16.gmra.mxu0 %v145
    %v169 = vpop.f32.mrf.mxu0
    %v170 = vadd.f32 %v157, %v169
    %v171 = vpop.f32.mrf.mxu0
    %172 = vdwg.mxu0
    %v173 = vmax.f32 %v170, 0.0
    %v174 = vpack.c.bf16 %v173, %v173
    %v175 = vld [vmem:[%s3] sm:$0xf]
    %v176 = vld [vmem:[%s3 + $0x4] sm:$0xf]
    %v177 = vld [vmem:[%s3 + $0x8] sm:$0xf]
    %v178 = vld [vmem:[%s3 + $0xc] sm:$0xf]
    %v179 = vld [vmem:[%s4] sm:$0x1]
    %v181 = vperm.slane %v179, 0
    %v187 = vunpack.c.l.b16 %v175
    %v188 = vunpack.c.l.b16 %v176
    %v189 = vunpack.c.l.b16 %v177
    %v190 = vunpack.c.l.b16 %v178
    %v191 = vpack.c.b16 %v188, %v187
    %v192 = vpack.c.b16 %v190, %v189
    %vm195 = vcmask 261120
    %v197 = vsel %vm195, %v174, 0
    %199 = vmatpush.bf16.msra.mxu0 0
    %200 = vmatpush.bf16.msra.mxu0 0
    %201 = vmatpush.bf16.msra.mxu0 0
    %202 = vmatpush.bf16.msra.mxu0 0
    %203 = vmatpush.bf16.msra.mxu0 0
    %204 = vmatpush.bf16.msra.mxu0 0
    %205 = vmatpush.bf16.msra.mxu0 %v192
    %206 = vmatpush.bf16.msra.mxu0 %v191
    %207 = vmatmul.bf16.gmra.mxu0 %v197
    %v208 = vpop.f32.mrf.mxu0
    %v209 = vadd.f32 %v181, %v208
    %v210 = vpop.f32.mrf.mxu0
    %211 = vdwg.mxu0
    %vm212 = vcmask 74752
    %v213 = vsel %vm212, %v209, -inf
    %214 = vmax.xlane.f32.xlu0 %v213
    %v215 = vpop.xlane.xlu0 %214
    %v216 = vsub.f32 %v209, %v215
    %v217 = vmul.f32 %v216, 1.442695
    %v218 = vpow.pop %v217
    %v219 = vsel %vm212, %v218, 0.0
    %220 = vadd.xlane.f32.xlu0 %v219
    %v221 = vpop.xlane.xlu0 %220
    %v222 = vlog2.pop %v221
    %v223 = vmul.f32 %v222, 0.6931472
    %v224 = vsub.f32 %v216, %v223
    %225 = vst.msk [vmem:[#allocation2] sm:$0x3] %vm212, %v224
    // Predicated region
    $region22: #{cnn1d_forward.5} parent=1 // pred_check
      _
    $region23: #{cnn1d_forward.5} parent=1 // pred_check_branch
      %227 = sbr.rel (0) target = $region25
    $region24: #{cnn1d_forward.5} parent=1 // pred_region
      %229 = vsyncadd [#allocation3], 0
      %s231 = sshll.u32 [#allocation2], 4
      %s232 = int_to_ptr.vmem [resolvable:$true] %s231
      %s233 = sshll.u32 %s5, 4
      %s234 = int_to_ptr.hbm [resolvable:$true] %s233
      %236 = dma.vmem_to_hbm [thread:$0]  %s232, 32, %s234, [#allocation3]
    $region25: #{cnn1d_forward.5} parent=1 // pred_fallthru
      _
    // Predicated region
    $region26: #{cnn1d_forward.5} parent=1 // pred_check
      _
    $region27: #{cnn1d_forward.5} parent=1 // pred_check_branch
      %238 = sbr.rel (0) target = $region29
    $region28: #{cnn1d_forward.5} parent=1 // pred_region
      %240 = dma.done [#allocation3], 32
    $region29: #{cnn1d_forward.5} parent=1 // pred_fallthru
      _
    %241 = vsyncpa [#allocation3], 1

</llo_original>
